<compile_context>
chip_gen: v7x
topology: tpu7x:2x2x1
jax: 0.10.0
libtpu: 0.0.40
codegen_flags: <defaults>
</compile_context>

<pallas_src>
import jax
import jax.numpy as jnp
from jax.experimental import pallas as pl
from jax.experimental.pallas import tpu as pltpu


def _round_up(x, m):
    return ((x + m - 1) // m) * m


# ----------------------------- kernel ----------------------------------------

def _neucdf_kernel(x_ref, w1c_ref, w23_ref, bias_ref, wo8_ref, bo_ref, out_ref):
    """Fused NeuCDF MLP. Weights VMEM-resident; [pred|ctx] streamed per batch tile."""
    Hp = wo8_ref.shape[1]
    bf16 = jnp.bfloat16

    # Fused layer 1 + context layer via block-diagonal weights:
    #   x @ [[W1,0],[0,Wc]] = [pred@W1 | ctx@Wc]   -> (TB, 2*Hp), f32 accumulation.
    h1c = jnp.dot(x_ref[...], w1c_ref[...], preferred_element_type=jnp.float32)
    h1c = jnp.maximum(h1c + bias_ref[0:1, :], 0.0)
    h = h1c[:, :Hp]          # relu(pred @ W1 + b1)
    c = h1c[:, Hp:]          # relu(ctx  @ Wc + bc)   (all-zero when context is None)

    # Layers 2 and 3 (W2 = w23[0], W3 = w23[1]); bf16 MXU operands, f32 accum + bias.
    h = jnp.maximum(
        jnp.dot(h.astype(bf16), w23_ref[0], preferred_element_type=jnp.float32)
        + bias_ref[1:2, :Hp], 0.0)
    h = jnp.maximum(
        jnp.dot(h.astype(bf16), w23_ref[1], preferred_element_type=jnp.float32)
        + bias_ref[1:2, Hp:], 0.0)
    h = h + c

    # Output layer as (8, Hp) @ (TB, Hp)^T -> (8, TB); row 0 holds the real output
    # weights (rows 1..7 are zero padding).  Writing the full 8-row tile keeps the
    # stores unmasked and lane-dense; the wrapper selects row 0.
    res = jax.lax.dot_general(
        wo8_ref[...], h.astype(bf16), (((1,), (1,)), ((), ())),
        preferred_element_type=jnp.float32)
    out_ref[...] = jax.nn.sigmoid(res + bo_ref[0, 0])


# ----------------------------- wrapper ---------------------------------------

def neucdf_forward(predicates, params, context=None, *, batch_tile=2048):
    """NeuCDF forward. `params` holds [in,out] weights / [1,out] biases (unpadded)."""
    f32, bf16 = jnp.float32, jnp.bfloat16
    B, F = predicates.shape
    H = params["w1"].shape[1]
    Hp = _round_up(H, 128)                       # lane-dense hidden width

    # Batch tiling: TB a multiple of 128; cap so there are >= 2 grid steps whenever the
    # padded batch allows it (keeps both v7x TensorCores busy on the "parallel" axis).
    Bp0 = _round_up(B, 128)
    TB = min(_round_up(min(batch_tile, Bp0), 128), Bp0)
    if Bp0 >= 256:
        TB = min(TB, _round_up(pl.cdiv(Bp0, 2), 128))
    Bp = _round_up(B, TB)
    n_tiles = Bp // TB

    # Streamed input: [pred | ctx] in bf16, batch zero-padded to a tile multiple.
    x = predicates.astype(bf16)
    if context is not None:
        x = jnp.concatenate([x, context.astype(bf16)], axis=1)
    Fin = x.shape[1]
    x = jnp.pad(x, ((0, Bp - B), (0, 0)))

    # Block-diagonal first-layer weight [[W1, 0], [0, Wc]] -> (Fin, 2*Hp) bf16.
    w1c = jnp.zeros((Fin, 2 * Hp), bf16)
    w1c = w1c.at[:F, :H].set(params["w1"].astype(bf16))
    # Stacked hidden weights (2, Hp, Hp) bf16: [0]=W2, [1]=W3 (zero padding is inert).
    w23 = jnp.zeros((2, Hp, Hp), bf16)
    w23 = w23.at[0, :H, :H].set(params["w2"].astype(bf16))
    w23 = w23.at[1, :H, :H].set(params["w3"].astype(bf16))
    # Bias slab (2, 2*Hp) f32: row 0 = [b1 | bc], row 1 = [b2 | b3].
    bias = jnp.zeros((2, 2 * Hp), f32)
    bias = bias.at[0, :H].set(params["b1"].astype(f32).reshape(-1))
    bias = bias.at[1, :H].set(params["b2"].astype(f32).reshape(-1))
    bias = bias.at[1, Hp:Hp + H].set(params["b3"].astype(f32).reshape(-1))
    if context is not None:
        w1c = w1c.at[F:, Hp:Hp + H].set(params["wc"].astype(bf16))
        bias = bias.at[0, Hp:Hp + H].set(params["bc"].astype(f32).reshape(-1))
    # Output weights as an (8, Hp) bf16 slab (row 0 = wo); bo as an SMEM scalar.
    wo8 = jnp.zeros((8, Hp), bf16).at[0, :H].set(params["wo"].astype(bf16).reshape(-1))
    bo = params["bo"].astype(f32).reshape(1, 1)

    def resident(shape):                          # constant index_map -> DMA'd once
        nd = len(shape)
        return pl.BlockSpec(shape, lambda i, nd=nd: (0,) * nd)

    out = pl.pallas_call(
        _neucdf_kernel,
        out_shape=jax.ShapeDtypeStruct((8, Bp), f32),
        grid=(n_tiles,),
        in_specs=[
            pl.BlockSpec((TB, Fin), lambda i: (i, 0)),           # streamed [pred|ctx]
            resident(w1c.shape),                                 # W1/Wc block-diag
            resident(w23.shape),                                 # stacked W2, W3
            resident(bias.shape),                                # bias slab (f32)
            resident(wo8.shape),                                 # output weights
            pl.BlockSpec(memory_space=pltpu.MemorySpace.SMEM),   # bo scalar
        ],
        out_specs=pl.BlockSpec((8, TB), lambda i: (0, i)),
        compiler_params=pltpu.CompilerParams(
            dimension_semantics=("parallel",),
            vmem_limit_bytes=48 * 1024 * 1024),
    )(x, w1c, w23, bias, wo8, bo)

    # Row 0 is the real output; drop batch padding -> (B, 1).
    return out[0, :B].reshape(B, 1)


# ----------------------------- param init & reference ------------------------

def init_params(key, predicate_feats, hid_units, context_size):
    """Deterministic synthetic parameters (same shapes as the nn.Linear layers)."""
    ks = jax.random.split(key, 10)

    def lin(kw, kb, fan_in, fan_out):
        bound = 1.0 / jnp.sqrt(fan_in)
        w = jax.random.uniform(kw, (fan_in, fan_out), jnp.float32, -bound, bound)
        b = jax.random.uniform(kb, (1, fan_out), jnp.float32, -bound, bound)
        return w, b

    w1, b1 = lin(ks[0], ks[1], predicate_feats, hid_units)
    w2, b2 = lin(ks[2], ks[3], hid_units, hid_units)
    w3, b3 = lin(ks[4], ks[5], hid_units, hid_units)
    wc, bc = lin(ks[6], ks[7], context_size, hid_units)
    wo, bo = lin(ks[8], ks[9], hid_units, 1)
    return dict(w1=w1, b1=b1, w2=w2, b2=b2, w3=w3, b3=b3,
                wc=wc, bc=bc, wo=wo, bo=bo)


def neucdf_reference(predicates, params, context=None):
    h = jax.nn.relu(predicates @ params["w1"] + params["b1"])
    h = jax.nn.relu(h @ params["w2"] + params["b2"])
    h = jax.nn.relu(h @ params["w3"] + params["b3"])
    if context is not None:
        h = h + jax.nn.relu(context @ params["wc"] + params["bc"])
    return jax.nn.sigmoid(h @ params["wo"] + params["bo"])


# ----------------------------- main -------------------------------------------

if __name__ == "__main__":
    predicate_feats = 16
    hid_units = 32
    context_size = 8
    batch = 8

    key = jax.random.PRNGKey(0)
    k_pred, k_ctx, k_par, k_pred2, k_ctx2 = jax.random.split(key, 5)

    predicates = jax.random.normal(k_pred, (batch, predicate_feats), jnp.float32)
    context = jax.random.normal(k_ctx, (batch, context_size), jnp.float32)
    params = init_params(k_par, predicate_feats, hid_units, context_size)

    # bf16 MXU operands with f32 accumulation -> compare against the f32 reference
    # at a loosened (2e-2) tolerance.
    TOL = dict(atol=2e-2, rtol=2e-2)

    # With context branch.
    out_ctx = jax.block_until_ready(neucdf_forward(predicates, params, context))
    ref_ctx = neucdf_reference(predicates, params, context)
    assert out_ctx.shape == (batch, 1)
    assert jnp.allclose(out_ctx, ref_ctx, **TOL)

    # Without context branch (context=None path of the PyTorch forward).
    out_noctx = jax.block_until_ready(neucdf_forward(predicates, params, None))
    ref_noctx = neucdf_reference(predicates, params, None)
    assert jnp.allclose(out_noctx, ref_noctx, **TOL)

    # Multi-tile grid path (batch not a tile multiple; small batch_tile forces >1 tile;
    # the >=2-tile cap also engages since the padded batch is >= 256).
    batch_big = 200
    pred_big = jax.random.normal(k_pred2, (batch_big, predicate_feats), jnp.float32)
    ctx_big = jax.random.normal(k_ctx2, (batch_big, context_size), jnp.float32)
    out_big = jax.block_until_ready(
        neucdf_forward(pred_big, params, ctx_big, batch_tile=128))
    ref_big = neucdf_reference(pred_big, params, ctx_big)
    assert out_big.shape == (batch_big, 1)
    assert jnp.allclose(out_big, ref_big, **TOL)

    print("KERNEL_OK")
</pallas_src>

<mosaic_0001>
module attributes {stable_mosaic.version = 11 : i64} {
  func.func @_neucdf_kernel(%arg0: i32, %arg1: memref<128x24xbf16, #tpu.memory_space<vmem>>, %arg2: memref<24x256xbf16, #tpu.memory_space<vmem>>, %arg3: memref<2x128x128xbf16, #tpu.memory_space<vmem>>, %arg4: memref<2x256xf32, #tpu.memory_space<vmem>>, %arg5: memref<8x128xbf16, #tpu.memory_space<vmem>>, %arg6: memref<1x1xf32, #tpu.memory_space<smem>>, %arg7: memref<8x128xf32, #tpu.memory_space<vmem>>) attributes {dimension_semantics = [#tpu.dimension_semantics<parallel>], iteration_bounds = array<i64: 1>, scalar_prefetch = 0 : i64, scratch_operands = 0 : i64, tpu.core_type = #tpu.core_type<tc>, window_params = [{transform_indices = @transform_0, window_bounds = array<i64: 128, 24>}, {pipeline_mode = #tpu.pipeline_mode<synchronous>, transform_indices = @transform_1, window_bounds = array<i64: 24, 256>}, {pipeline_mode = #tpu.pipeline_mode<synchronous>, transform_indices = @transform_2, window_bounds = array<i64: 2, 128, 128>}, {pipeline_mode = #tpu.pipeline_mode<synchronous>, transform_indices = @transform_3, window_bounds = array<i64: 2, 256>}, {pipeline_mode = #tpu.pipeline_mode<synchronous>, transform_indices = @transform_4, window_bounds = array<i64: 8, 128>}, {transform_indices = @transform_5, window_bounds = array<i64: 1, 1>}, {transform_indices = @transform_6, window_bounds = array<i64: 8, 128>}]} {
    %c0 = arith.constant 0 : index
    %c0_0 = arith.constant 0 : index
    %0 = vector.load %arg1[%c0, %c0_0] : memref<128x24xbf16, #tpu.memory_space<vmem>>, vector<128x24xbf16>
    %c0_1 = arith.constant 0 : index
    %c0_2 = arith.constant 0 : index
    %1 = vector.load %arg2[%c0_1, %c0_2] : memref<24x256xbf16, #tpu.memory_space<vmem>>, vector<24x256xbf16>
    %cst = arith.constant dense<0.000000e+00> : vector<128x256xf32>
    %2 = tpu.matmul %0, %1, %cst {dimension_numbers = #tpu.dot_dimension_numbers<[1], [0], [0], [1], [0, 0, 1, 1], [], []>} : vector<128x24xbf16>, vector<24x256xbf16>, vector<128x256xf32> -> vector<128x256xf32>
    %c0_3 = arith.constant 0 : index
    %c0_4 = arith.constant 0 : index
    %3 = vector.load %arg4[%c0_3, %c0_4] : memref<2x256xf32, #tpu.memory_space<vmem>>, vector<1x256xf32>
    %4 = vector.broadcast %3 : vector<1x256xf32> to vector<128x256xf32>
    %5 = arith.addf %2, %4 : vector<128x256xf32>
    %cst_5 = arith.constant 0.000000e+00 : f32
    %6 = vector.broadcast %cst_5 : f32 to vector<128x256xf32>
    %7 = arith.maximumf %5, %6 : vector<128x256xf32>
    %8 = vector.extract_strided_slice %7 {offsets = [0, 0], sizes = [128, 128], strides = [1, 1]} : vector<128x256xf32> to vector<128x128xf32>
    %9 = vector.extract_strided_slice %7 {offsets = [0, 128], sizes = [128, 128], strides = [1, 1]} : vector<128x256xf32> to vector<128x128xf32>
    %10 = arith.truncf %8 : vector<128x128xf32> to vector<128x128xbf16>
    %c0_6 = arith.constant 0 : index
    %c0_7 = arith.constant 0 : index
    %c0_8 = arith.constant 0 : index
    %11 = vector.load %arg3[%c0_6, %c0_7, %c0_8] : memref<2x128x128xbf16, #tpu.memory_space<vmem>>, vector<1x128x128xbf16>
    %12 = vector.shape_cast %11 : vector<1x128x128xbf16> to vector<128x128xbf16>
    %cst_9 = arith.constant dense<0.000000e+00> : vector<128x128xf32>
    %13 = tpu.matmul %10, %12, %cst_9 {dimension_numbers = #tpu.dot_dimension_numbers<[1], [0], [0], [1], [0, 0, 1, 1], [], []>} : vector<128x128xbf16>, vector<128x128xbf16>, vector<128x128xf32> -> vector<128x128xf32>
    %c1 = arith.constant 1 : index
    %c0_10 = arith.constant 0 : index
    %14 = vector.load %arg4[%c1, %c0_10] : memref<2x256xf32, #tpu.memory_space<vmem>>, vector<1x128xf32>
    %15 = vector.broadcast %14 : vector<1x128xf32> to vector<128x128xf32>
    %16 = arith.addf %13, %15 : vector<128x128xf32>
    %cst_11 = arith.constant 0.000000e+00 : f32
    %17 = vector.broadcast %cst_11 : f32 to vector<128x128xf32>
    %18 = arith.maximumf %16, %17 : vector<128x128xf32>
    %19 = arith.truncf %18 : vector<128x128xf32> to vector<128x128xbf16>
    %c1_12 = arith.constant 1 : index
    %c0_13 = arith.constant 0 : index
    %c0_14 = arith.constant 0 : index
    %20 = vector.load %arg3[%c1_12, %c0_13, %c0_14] : memref<2x128x128xbf16, #tpu.memory_space<vmem>>, vector<1x128x128xbf16>
    %21 = vector.shape_cast %20 : vector<1x128x128xbf16> to vector<128x128xbf16>
    %cst_15 = arith.constant dense<0.000000e+00> : vector<128x128xf32>
    %22 = tpu.matmul %19, %21, %cst_15 {dimension_numbers = #tpu.dot_dimension_numbers<[1], [0], [0], [1], [0, 0, 1, 1], [], []>} : vector<128x128xbf16>, vector<128x128xbf16>, vector<128x128xf32> -> vector<128x128xf32>
    %c1_16 = arith.constant 1 : index
    %c128 = arith.constant 128 : index
    %23 = vector.load %arg4[%c1_16, %c128] : memref<2x256xf32, #tpu.memory_space<vmem>>, vector<1x128xf32>
    %24 = vector.broadcast %23 : vector<1x128xf32> to vector<128x128xf32>
    %25 = arith.addf %22, %24 : vector<128x128xf32>
    %cst_17 = arith.constant 0.000000e+00 : f32
    %26 = vector.broadcast %cst_17 : f32 to vector<128x128xf32>
    %27 = arith.maximumf %25, %26 : vector<128x128xf32>
    %28 = arith.addf %27, %9 : vector<128x128xf32>
    %c0_18 = arith.constant 0 : index
    %c0_19 = arith.constant 0 : index
    %29 = vector.load %arg5[%c0_18, %c0_19] : memref<8x128xbf16, #tpu.memory_space<vmem>>, vector<8x128xbf16>
    %30 = arith.truncf %28 : vector<128x128xf32> to vector<128x128xbf16>
    %cst_20 = arith.constant dense<0.000000e+00> : vector<8x128xf32>
    %31 = tpu.matmul %29, %30, %cst_20 {dimension_numbers = #tpu.dot_dimension_numbers<[1], [1], [0], [0], [0, 0, 1, 0], [], []>} : vector<8x128xbf16>, vector<128x128xbf16>, vector<8x128xf32> -> vector<8x128xf32>
    %c0_21 = arith.constant 0 : index
    %c0_22 = arith.constant 0 : index
    %32 = memref.load %arg6[%c0_21, %c0_22] : memref<1x1xf32, #tpu.memory_space<smem>>
    %33 = vector.broadcast %32 : f32 to vector<8x128xf32>
    %34 = arith.addf %31, %33 : vector<8x128xf32>
    %35 = arith.negf %34 : vector<8x128xf32>
    %36 = math.exp %35 : vector<8x128xf32>
    %cst_23 = arith.constant 1.000000e+00 : f32
    %37 = vector.broadcast %cst_23 : f32 to vector<8x128xf32>
    %38 = arith.addf %37, %36 : vector<8x128xf32>
    %39 = arith.divf %37, %38 : vector<8x128xf32>
    %c0_24 = arith.constant 0 : index
    %c0_25 = arith.constant 0 : index
    %40 = vector.load %arg7[%c0_24, %c0_25] : memref<8x128xf32, #tpu.memory_space<vmem>>, vector<8x128xf32>
    tpu.vector_store %arg7[%c0_24, %c0_25], %39 {strides = array<i32>} : memref<8x128xf32, #tpu.memory_space<vmem>>, vector<8x128xf32>,
    return
  }
  func.func @transform_0(%arg0: i32) -> (i32, i32) {
    %c0_i32 = arith.constant 0 : i32
    %c0_i32_0 = arith.constant 0 : i32
    return %arg0, %c0_i32 : i32, i32
  }
  func.func @transform_1(%arg0: i32) -> (i32, i32) {
    %c0_i32 = arith.constant 0 : i32
    %c0_i32_0 = arith.constant 0 : i32
    %c0_i32_1 = arith.constant 0 : i32
    return %c0_i32, %c0_i32_0 : i32, i32
  }
  func.func @transform_2(%arg0: i32) -> (i32, i32, i32) {
    %c0_i32 = arith.constant 0 : i32
    %c0_i32_0 = arith.constant 0 : i32
    %c0_i32_1 = arith.constant 0 : i32
    %c0_i32_2 = arith.constant 0 : i32
    return %c0_i32, %c0_i32_0, %c0_i32_1 : i32, i32, i32
  }
  func.func @transform_3(%arg0: i32) -> (i32, i32) {
    %c0_i32 = arith.constant 0 : i32
    %c0_i32_0 = arith.constant 0 : i32
    %c0_i32_1 = arith.constant 0 : i32
    return %c0_i32, %c0_i32_0 : i32, i32
  }
  func.func @transform_4(%arg0: i32) -> (i32, i32) {
    %c0_i32 = arith.constant 0 : i32
    %c0_i32_0 = arith.constant 0 : i32
    %c0_i32_1 = arith.constant 0 : i32
    return %c0_i32, %c0_i32_0 : i32, i32
  }
  func.func @transform_5(%arg0: i32) -> (i32, i32) {
    %c0_i32 = arith.constant 0 : i32
    %c0_i32_0 = arith.constant 0 : i32
    %c0_i32_1 = arith.constant 0 : i32
    return %c0_i32, %c0_i32_0 : i32, i32
  }
  func.func @transform_6(%arg0: i32) -> (i32, i32) {
    %c0_i32 = arith.constant 0 : i32
    %c0_i32_0 = arith.constant 0 : i32
    return %c0_i32, %arg0 : i32, i32
  }
}

</mosaic_0001>

<llo_original>
// kernel: tpu_custom_call.1
$region0: #{tpu_custom_call.1}
  #allocation0 [shape = 'u32[]', space=smem, size = 0x4, offset = 0x4, fixed_abs, tag = 'smem constant byte address 0x4 - core index']
  #allocation1 [shape = 'u32[144,128]{1,0:T(1,128)}', space=vmem, size = 0x12000, scoped, tag = 'internal scratch']
  #allocation2 [shape = 'f32[1,1]{1,0:T(1,128)S(6)}', space=smem, size = 0x200, scoped, tag = 'scoped memory for tpu_custom_call.1']
  %s0 = inlined_call_operand.vmem [shape: bf16[128,24], index: 0, kind: input, shape index: {}]
  %s1 = inlined_call_operand.vmem [shape: bf16[24,256], index: 1, kind: input, shape index: {}]
  %s2 = inlined_call_operand.hbm [shape: bf16[2,128,128], index: 2, kind: input, shape index: {}]
  %s3 = inlined_call_operand.vmem [shape: f32[2,256], index: 3, kind: input, shape index: {}]
  %s4 = inlined_call_operand.vmem [shape: bf16[8,128], index: 4, kind: input, shape index: {}]
  %s5 = inlined_call_operand.<no memory space> [shape: f32[1,1], index: 5, kind: input, shape index: {}]
  %s6 = inlined_call_operand.hbm [shape: f32[8,128], index: 6, kind: output, shape index: {}]
  %s7 = sld [smem:[#allocation0]]
  $region38: #{tpu_custom_call.1} parent=0
    _
  %s9 = ssub.s32 1, %s7
  %s10 = scalar_select 0, %s9, %s7
  %11 = sst [smem:[#allocation2]] %s5
  $region1: #{tpu_custom_call.1} parent=0
    #allocation3 [shape = 'u8[65536]{0}', space=vmem, size = 0x10000, scoped, tag = 'input window, operand 2, single buffered']
    #allocation4 [shape = 's32[1]{0}', space=sflag, size = 0x4, scoped, tag = 'scoped memory for tpu_custom_call.1']
    #allocation5 [shape = 's32[1]{0}', space=sflag, size = 0x4, scoped, tag = 'scoped memory for tpu_custom_call.1']
    #allocation6 [shape = 'u8[4096]{0}', space=vmem, size = 0x1000, scoped, tag = 'output window, operand 0, single buffered']
    %12 = vsyncpa [#allocation4], 0
    %13 = vsyncpa [#allocation5], 0
    // Predicated region
    $region2: #{tpu_custom_call.1} parent=1 // pred_check
      _
    $region3: #{tpu_custom_call.1} parent=1 // pred_check_branch
      %15 = sbr.rel (0) target = $region5
    $region4: #{tpu_custom_call.1} parent=1 // pred_region
      _
    $region5: #{tpu_custom_call.1} parent=1 // pred_fallthru
      _
    // Predicated region
    $region6: #{tpu_custom_call.1} parent=1 // pred_check
      _
    $region7: #{tpu_custom_call.1} parent=1 // pred_check_branch
      %17 = sbr.rel (0) target = $region9
    $region8: #{tpu_custom_call.1} parent=1 // pred_region
      _
    $region9: #{tpu_custom_call.1} parent=1 // pred_fallthru
      _
    // Predicated region
    $region10: #{tpu_custom_call.1} parent=1 // pred_check
      _
    $region11: #{tpu_custom_call.1} parent=1 // pred_check_branch
      %19 = sbr.rel (0) target = $region13
    $region12: #{tpu_custom_call.1} parent=1 // pred_region
      %s21 = ssub.s32 2048, 2048
      %22 = vsyncadd [#allocation4], %s21
      %s23 = sshll.u32 [#allocation3], 4
      %s24 = int_to_ptr.vmem [resolvable:$true] %s23
      %29 = dma.hbm_to_vmem [thread:$0]  %s2, 2048, %s24, [#allocation4], 64, 64, 4
    $region13: #{tpu_custom_call.1} parent=1 // pred_fallthru
      _
    // Predicated region
    $region14: #{tpu_custom_call.1} parent=1 // pred_check
      _
    $region15: #{tpu_custom_call.1} parent=1 // pred_check_branch
      %31 = sbr.rel (0) target = $region17
    $region16: #{tpu_custom_call.1} parent=1 // pred_region
      _
    $region17: #{tpu_custom_call.1} parent=1 // pred_fallthru
      _
    // Predicated region
    $region18: #{tpu_custom_call.1} parent=1 // pred_check
      _
    $region19: #{tpu_custom_call.1} parent=1 // pred_check_branch
      %33 = sbr.rel (0) target = $region21
    $region20: #{tpu_custom_call.1} parent=1 // pred_region
      _
    $region21: #{tpu_custom_call.1} parent=1 // pred_fallthru
      _
    // Predicated region
    $region22: #{tpu_custom_call.1} parent=1 // pred_check
      _
    $region23: #{tpu_custom_call.1} parent=1 // pred_check_branch
      %35 = sbr.rel (0) target = $region25
    $region24: #{tpu_custom_call.1} parent=1 // pred_region
      _
    $region25: #{tpu_custom_call.1} parent=1 // pred_fallthru
      _
    // Predicated region
    $region26: #{tpu_custom_call.1} parent=1 // pred_check
      _
    $region27: #{tpu_custom_call.1} parent=1 // pred_check_branch
      %37 = sbr.rel (0) target = $region29
    $region28: #{tpu_custom_call.1} parent=1 // pred_region
      %38 = dma.done [#allocation4], 2048
    $region29: #{tpu_custom_call.1} parent=1 // pred_fallthru
      _
    %v40 = vld [vmem:[%s0] sm:$0xf]
    %v41 = vld [vmem:[%s0 + $0x4] sm:$0xf]
    %v42 = vld [vmem:[%s0 + $0x8] sm:$0xf]
    %v43 = vld [vmem:[%s0 + $0xc] sm:$0xf]
    %v44 = vld [vmem:[%s0 + $0x10] sm:$0xf]
    %v45 = vld [vmem:[%s0 + $0x14] sm:$0xf]
    %v46 = vld [vmem:[%s0 + $0x18] sm:$0xf]
    %v47 = vld [vmem:[%s0 + $0x1c] sm:$0xf]
    %v48 = vld [vmem:[%s0 + $0x20] sm:$0xf]
    %v49 = vld [vmem:[%s0 + $0x24] sm:$0xf]
    %v50 = vld [vmem:[%s0 + $0x28] sm:$0xf]
    %v51 = vld [vmem:[%s0 + $0x2c] sm:$0xf]
    %v52 = vld [vmem:[%s0 + $0x30] sm:$0xf]
    %v53 = vld [vmem:[%s0 + $0x34] sm:$0xf]
    %v54 = vld [vmem:[%s0 + $0x38] sm:$0xf]
    %v55 = vld [vmem:[%s0 + $0x3c] sm:$0xf]
    %v56 = vld [vmem:[%s1] sm:$0xff]
    %v57 = vld [vmem:[%s1 + $0x8] sm:$0xff]
    %v58 = vld [vmem:[%s1 + $0x10] sm:$0xff]
    %v59 = vld [vmem:[%s3] ss:$2 sm:$0x3]
    %v61 = vlaneseq
    %v62 = vshrl.u32 %v61, 7
    %v63 = vsub.s32 0, %v62
    %v64 = vrot.slane %v59, %v63
    %v65 = vlaneseq
    %v66 = vshrl.u32 %v65, 7
    %v67 = vsub.s32 1, %v66
    %v68 = vrot.slane %v59, %v67
    %v87 = vunpack.c.l.b16 %v40
    %v88 = vunpack.c.l.b16 %v41
    %v89 = vunpack.c.l.b16 %v42
    %v90 = vunpack.c.l.b16 %v43
    %v91 = vunpack.c.l.b16 %v44
    %v92 = vunpack.c.l.b16 %v45
    %v93 = vunpack.c.l.b16 %v46
    %v94 = vunpack.c.l.b16 %v47
    %v95 = vunpack.c.l.b16 %v48
    %v96 = vunpack.c.l.b16 %v49
    %v97 = vunpack.c.l.b16 %v50
    %v98 = vunpack.c.l.b16 %v51
    %v99 = vunpack.c.l.b16 %v52
    %v100 = vunpack.c.l.b16 %v53
    %v101 = vunpack.c.l.b16 %v54
    %v102 = vunpack.c.l.b16 %v55
    %v103 = vpack.c.b16 %v88, %v87
    %v104 = vpack.c.b16 %v90, %v89
    %v105 = vpack.c.b16 %v92, %v91
    %v106 = vpack.c.b16 %v94, %v93
    %v107 = vpack.c.b16 %v96, %v95
    %v108 = vpack.c.b16 %v98, %v97
    %v109 = vpack.c.b16 %v100, %v99
    %v110 = vpack.c.b16 %v102, %v101
    %v114 = vunpack.c.l.b16 %v56
    %v115 = vunpack.c.h.b16 %v56
    %v116 = vunpack.c.l.b16 %v57
    %v117 = vunpack.c.h.b16 %v57
    %v118 = vunpack.c.l.b16 %v58
    %v119 = vunpack.c.h.b16 %v58
    %v120 = vpack.c.b16 %v116, %v114
    %v121 = vpack.c.b16 %v117, %v115
    %v122 = vpack.c.b16 %v118, %v118
    %v123 = vpack.c.b16 %v119, %v119
    %vm126 = vcmask 195584
    %v128 = vsel %vm126, %v103, 0
    %v131 = vsel %vm126, %v104, 0
    %v134 = vsel %vm126, %v105, 0
    %v137 = vsel %vm126, %v106, 0
    %v140 = vsel %vm126, %v107, 0
    %v143 = vsel %vm126, %v108, 0
    %v146 = vsel %vm126, %v109, 0
    %v149 = vsel %vm126, %v110, 0
    %vm151 = vcmask 1043456
    %v153 = vsel %vm151, %v122, 0
    %v156 = vsel %vm151, %v123, 0
    %158 = vmatprep.subr.bf16.mxu0 %v121
    %159 = vmatpush1.bf16.msra.mxu0 %v120
    %160 = vmatprep.subr.bf16.mxu0 %v156
    %161 = vmatpush1.bf16.msra.mxu0 %v153
    %162 = vmatprep.subr.bf16.mxu0 0
    %163 = vmatpush1.bf16.msra.mxu0 0
    %164 = vmatprep.subr.bf16.mxu0 0
    %165 = vmatpush1.bf16.msra.mxu0 0
    %166 = vmatprep.subr.bf16.mxu0 0
    %167 = vmatpush1.bf16.msra.mxu0 0
    %168 = vmatprep.subr.bf16.mxu0 0
    %169 = vmatpush1.bf16.msra.mxu0 0
    %170 = vmatprep.subr.bf16.mxu0 0
    %171 = vmatpush1.bf16.msra.mxu0 0
    %172 = vmatprep.subr.bf16.mxu0 0
    %173 = vmatpush1.bf16.msra.mxu0 0
    %174 = vmatprep.subr.bf16.mxu0 0
    %175 = vmatpush1.bf16.msra.mxu0 0
    %176 = vmatprep.subr.bf16.mxu0 0
    %177 = vmatpush1.bf16.msra.mxu0 0
    %178 = vmatprep.subr.bf16.mxu0 0
    %179 = vmatpush1.bf16.msra.mxu0 0
    %180 = vmatprep.subr.bf16.mxu0 0
    %181 = vmatpush1.bf16.msra.mxu0 0
    %182 = vmatprep.subr.bf16.mxu0 0
    %183 = vmatpush1.bf16.msra.mxu0 0
    %184 = vmatprep.subr.bf16.mxu0 0
    %185 = vmatpush1.bf16.msra.mxu0 0
    %186 = vmatprep.subr.bf16.mxu0 0
    %187 = vmatpush1.bf16.msra.mxu0 0
    %188 = vmatprep.subr.bf16.mxu0 0
    %189 = vmatpush1.bf16.msra.mxu0 0
    %190 = vmatprep.mubr.bf16.mxu0 0
    %191 = vmatmul.mubr.bf16.gmra.mrb[0].mxu0 %v128
    %v192 = vpop.f32.mrb[0].mxu0
    %v193 = vadd.f32 %v64, %v192
    %v194 = vpop.f32.mrb[0].mxu0
    %v195 = vadd.f32 %v68, %v194
    %v196 = vpop.f32.mrb[0].mxu0
    %v197 = vadd.f32 %v64, %v196
    %v198 = vpop.f32.mrb[0].mxu0
    %v199 = vadd.f32 %v68, %v198
    %200 = vmatprep.mubr.bf16.mxu0 0
    %201 = vmatmul.mubr.bf16.gmra.mrb[0].mxu0 %v131
    %v202 = vpop.f32.mrb[0].mxu0
    %v203 = vadd.f32 %v64, %v202
    %v204 = vpop.f32.mrb[0].mxu0
    %v205 = vadd.f32 %v68, %v204
    %v206 = vpop.f32.mrb[0].mxu0
    %v207 = vadd.f32 %v64, %v206
    %v208 = vpop.f32.mrb[0].mxu0
    %v209 = vadd.f32 %v68, %v208
    %210 = vmatprep.mubr.bf16.mxu0 0
    %211 = vmatmul.mubr.bf16.gmra.mrb[0].mxu0 %v134
    %v212 = vpop.f32.mrb[0].mxu0
    %v213 = vadd.f32 %v64, %v212
    %v214 = vpop.f32.mrb[0].mxu0
    %v215 = vadd.f32 %v68, %v214
    %v216 = vpop.f32.mrb[0].mxu0
    %v217 = vadd.f32 %v64, %v216
    %v218 = vpop.f32.mrb[0].mxu0
    %v219 = vadd.f32 %v68, %v218
    %220 = vmatprep.mubr.bf16.mxu0 0
    %221 = vmatmul.mubr.bf16.gmra.mrb[0].mxu0 %v137
    %v222 = vpop.f32.mrb[0].mxu0
    %v223 = vadd.f32 %v64, %v222
    %v224 = vpop.f32.mrb[0].mxu0
    %v225 = vadd.f32 %v68, %v224
    %v226 = vpop.f32.mrb[0].mxu0
    %v227 = vadd.f32 %v64, %v226
    %v228 = vpop.f32.mrb[0].mxu0
    %v229 = vadd.f32 %v68, %v228
    %230 = vmatprep.mubr.bf16.mxu0 0
    %231 = vmatmul.mubr.bf16.gmra.mrb[0].mxu0 %v140
    %v232 = vpop.f32.mrb[0].mxu0
    %v233 = vadd.f32 %v64, %v232
    %v234 = vpop.f32.mrb[0].mxu0
    %v235 = vadd.f32 %v68, %v234
    %v236 = vpop.f32.mrb[0].mxu0
    %v237 = vadd.f32 %v64, %v236
    %v238 = vpop.f32.mrb[0].mxu0
    %v239 = vadd.f32 %v68, %v238
    %240 = vmatprep.mubr.bf16.mxu0 0
    %241 = vmatmul.mubr.bf16.gmra.mrb[0].mxu0 %v143
    %v242 = vpop.f32.mrb[0].mxu0
    %v243 = vadd.f32 %v64, %v242
    %v244 = vpop.f32.mrb[0].mxu0
    %v245 = vadd.f32 %v68, %v244
    %v246 = vpop.f32.mrb[0].mxu0
    %v247 = vadd.f32 %v64, %v246
    %v248 = vpop.f32.mrb[0].mxu0
    %v249 = vadd.f32 %v68, %v248
    %250 = vmatprep.mubr.bf16.mxu0 0
    %251 = vmatmul.mubr.bf16.gmra.mrb[0].mxu0 %v146
    %v252 = vpop.f32.mrb[0].mxu0
    %v253 = vadd.f32 %v64, %v252
    %v254 = vpop.f32.mrb[0].mxu0
    %v255 = vadd.f32 %v68, %v254
    %v256 = vpop.f32.mrb[0].mxu0
    %v257 = vadd.f32 %v64, %v256
    %v258 = vpop.f32.mrb[0].mxu0
    %v259 = vadd.f32 %v68, %v258
    %260 = vmatprep.mubr.bf16.mxu0 0
    %261 = vmatmul.mubr.bf16.gmra.mrb[0].mxu0 %v149
    %v262 = vpop.f32.mrb[0].mxu0
    %v263 = vadd.f32 %v64, %v262
    %v264 = vpop.f32.mrb[0].mxu0
    %v265 = vadd.f32 %v68, %v264
    %v266 = vpop.f32.mrb[0].mxu0
    %v267 = vadd.f32 %v64, %v266
    %v268 = vpop.f32.mrb[0].mxu0
    %v269 = vadd.f32 %v68, %v268
    %270 = vdwg.mxu0
    %v271 = vmax.f32 %v193, 0.0
    %v272 = vmax.f32 %v195, 0.0
    %v273 = vmax.f32 %v197, 0.0
    %v274 = vmax.f32 %v199, 0.0
    %v275 = vmax.f32 %v203, 0.0
    %v276 = vmax.f32 %v205, 0.0
    %v277 = vmax.f32 %v207, 0.0
    %v278 = vmax.f32 %v209, 0.0
    %v279 = vmax.f32 %v213, 0.0
    %v280 = vmax.f32 %v215, 0.0
    %v281 = vmax.f32 %v217, 0.0
    %v282 = vmax.f32 %v219, 0.0
    %v283 = vmax.f32 %v223, 0.0
    %v284 = vmax.f32 %v225, 0.0
    %v285 = vmax.f32 %v227, 0.0
    %v286 = vmax.f32 %v229, 0.0
    %v287 = vmax.f32 %v233, 0.0
    %v288 = vmax.f32 %v235, 0.0
    %v289 = vmax.f32 %v237, 0.0
    %v290 = vmax.f32 %v239, 0.0
    %v291 = vmax.f32 %v243, 0.0
    %v292 = vmax.f32 %v245, 0.0
    %v293 = vmax.f32 %v247, 0.0
    %v294 = vmax.f32 %v249, 0.0
    %v295 = vmax.f32 %v253, 0.0
    %v296 = vmax.f32 %v255, 0.0
    %v297 = vmax.f32 %v257, 0.0
    %v298 = vmax.f32 %v259, 0.0
    %v299 = vmax.f32 %v263, 0.0
    %v300 = vmax.f32 %v265, 0.0
    %v301 = vmax.f32 %v267, 0.0
    %v302 = vmax.f32 %v269, 0.0
    %v303 = vpack.c.bf16 %v273, %v271
    %v304 = vpack.c.bf16 %v277, %v275
    %v305 = vpack.c.bf16 %v281, %v279
    %v306 = vpack.c.bf16 %v285, %v283
    %v307 = vpack.c.bf16 %v289, %v287
    %v308 = vpack.c.bf16 %v293, %v291
    %v309 = vpack.c.bf16 %v297, %v295
    %v310 = vpack.c.bf16 %v301, %v299
    %v311 = vld [vmem:[#allocation3] sm:$0xf]
    %v312 = vld [vmem:[#allocation3 + $0x4] sm:$0xf]
    %v313 = vld [vmem:[#allocation3 + $0x8] sm:$0xf]
    %v314 = vld [vmem:[#allocation3 + $0xc] sm:$0xf]
    %v315 = vld [vmem:[#allocation3 + $0x10] sm:$0xf]
    %v316 = vld [vmem:[#allocation3 + $0x14] sm:$0xf]
    %v317 = vld [vmem:[#allocation3 + $0x18] sm:$0xf]
    %v318 = vld [vmem:[#allocation3 + $0x1c] sm:$0xf]
    %v319 = vld [vmem:[#allocation3 + $0x20] sm:$0xf]
    %v320 = vld [vmem:[#allocation3 + $0x24] sm:$0xf]
    %v321 = vld [vmem:[#allocation3 + $0x28] sm:$0xf]
    %v322 = vld [vmem:[#allocation3 + $0x2c] sm:$0xf]
    %v323 = vld [vmem:[#allocation3 + $0x30] sm:$0xf]
    %v324 = vld [vmem:[#allocation3 + $0x34] sm:$0xf]
    %v325 = vld [vmem:[#allocation3 + $0x38] sm:$0xf]
    %v326 = vld [vmem:[#allocation3 + $0x3c] sm:$0xf]
    %v327 = vld [vmem:[%s3 + $0x1] sm:$0x1]
    %v328 = vlaneseq
    %v329 = vshrl.u32 %v328, 7
    %v330 = vsub.s32 0, %v329
    %v331 = vrot.slane %v327, %v330
    %v348 = vunpack.c.l.b16 %v311
    %v349 = vunpack.c.l.b16 %v312
    %v350 = vunpack.c.l.b16 %v313
    %v351 = vunpack.c.l.b16 %v314
    %v352 = vunpack.c.l.b16 %v315
    %v353 = vunpack.c.l.b16 %v316
    %v354 = vunpack.c.l.b16 %v317
    %v355 = vunpack.c.l.b16 %v318
    %v356 = vunpack.c.l.b16 %v319
    %v357 = vunpack.c.l.b16 %v320
    %v358 = vunpack.c.l.b16 %v321
    %v359 = vunpack.c.l.b16 %v322
    %v360 = vunpack.c.l.b16 %v323
    %v361 = vunpack.c.l.b16 %v324
    %v362 = vunpack.c.l.b16 %v325
    %v363 = vunpack.c.l.b16 %v326
    %v364 = vpack.c.b16 %v349, %v348
    %v365 = vpack.c.b16 %v351, %v350
    %v366 = vpack.c.b16 %v353, %v352
    %v367 = vpack.c.b16 %v355, %v354
    %v368 = vpack.c.b16 %v357, %v356
    %v369 = vpack.c.b16 %v359, %v358
    %v370 = vpack.c.b16 %v361, %v360
    %v371 = vpack.c.b16 %v363, %v362
    %380 = vmatprep.subr.bf16.mxu0 0
    %381 = vmatpush1.bf16.msra.mxu0 %v364
    %382 = vmatprep.subr.bf16.mxu0 0
    %383 = vmatpush1.bf16.msra.mxu0 %v365
    %384 = vmatprep.subr.bf16.mxu0 0
    %385 = vmatpush1.bf16.msra.mxu0 %v366
    %386 = vmatprep.subr.bf16.mxu0 0
    %387 = vmatpush1.bf16.msra.mxu0 %v367
    %388 = vmatprep.subr.bf16.mxu0 0
    %389 = vmatpush1.bf16.msra.mxu0 %v368
    %390 = vmatprep.subr.bf16.mxu0 0
    %391 = vmatpush1.bf16.msra.mxu0 %v369
    %392 = vmatprep.subr.bf16.mxu0 0
    %393 = vmatpush1.bf16.msra.mxu0 %v370
    %394 = vmatprep.subr.bf16.mxu0 0
    %395 = vmatpush1.bf16.msra.mxu0 %v371
    %396 = vmatprep.subr.bf16.mxu0 0
    %397 = vmatpush1.bf16.msra.mxu0 0
    %398 = vmatprep.subr.bf16.mxu0 0
    %399 = vmatpush1.bf16.msra.mxu0 0
    %400 = vmatprep.subr.bf16.mxu0 0
    %401 = vmatpush1.bf16.msra.mxu0 0
    %402 = vmatprep.subr.bf16.mxu0 0
    %403 = vmatpush1.bf16.msra.mxu0 0
    %404 = vmatprep.subr.bf16.mxu0 0
    %405 = vmatpush1.bf16.msra.mxu0 0
    %406 = vmatprep.subr.bf16.mxu0 0
    %407 = vmatpush1.bf16.msra.mxu0 0
    %408 = vmatprep.subr.bf16.mxu0 0
    %409 = vmatpush1.bf16.msra.mxu0 0
    %410 = vmatprep.subr.bf16.mxu0 0
    %411 = vmatpush1.bf16.msra.mxu0 0
    %412 = vmatprep.mubr.bf16.mxu0 0
    %413 = vmatmul.mubr.bf16.gmra.mrb[0].mxu0 %v303
    %v414 = vpop.f32.mrb[0].mxu0
    %v415 = vadd.f32 %v331, %v414
    %v416 = vpop.f32.mrb[0].mxu0
    %v417 = vpop.f32.mrb[0].mxu0
    %v418 = vadd.f32 %v331, %v417
    %v419 = vpop.f32.mrb[0].mxu0
    %420 = vmatprep.mubr.bf16.mxu0 0
    %421 = vmatmul.mubr.bf16.gmra.mrb[0].mxu0 %v304
    %v422 = vpop.f32.mrb[0].mxu0
    %v423 = vadd.f32 %v331, %v422
    %v424 = vpop.f32.mrb[0].mxu0
    %v425 = vpop.f32.mrb[0].mxu0
    %v426 = vadd.f32 %v331, %v425
    %v427 = vpop.f32.mrb[0].mxu0
    %428 = vmatprep.mubr.bf16.mxu0 0
    %429 = vmatmul.mubr.bf16.gmra.mrb[0].mxu0 %v305
    %v430 = vpop.f32.mrb[0].mxu0
    %v431 = vadd.f32 %v331, %v430
    %v432 = vpop.f32.mrb[0].mxu0
    %v433 = vpop.f32.mrb[0].mxu0
    %v434 = vadd.f32 %v331, %v433
    %v435 = vpop.f32.mrb[0].mxu0
    %436 = vmatprep.mubr.bf16.mxu0 0
    %437 = vmatmul.mubr.bf16.gmra.mrb[0].mxu0 %v306
    %v438 = vpop.f32.mrb[0].mxu0
    %v439 = vadd.f32 %v331, %v438
    %v440 = vpop.f32.mrb[0].mxu0
    %v441 = vpop.f32.mrb[0].mxu0
    %v442 = vadd.f32 %v331, %v441
    %v443 = vpop.f32.mrb[0].mxu0
    %444 = vmatprep.mubr.bf16.mxu0 0
    %445 = vmatmul.mubr.bf16.gmra.mrb[0].mxu0 %v307
    %v446 = vpop.f32.mrb[0].mxu0
    %v447 = vadd.f32 %v331, %v446
    %v448 = vpop.f32.mrb[0].mxu0
    %v449 = vpop.f32.mrb[0].mxu0
    %v450 = vadd.f32 %v331, %v449
    %v451 = vpop.f32.mrb[0].mxu0
    %452 = vmatprep.mubr.bf16.mxu0 0
    %453 = vmatmul.mubr.bf16.gmra.mrb[0].mxu0 %v308
    %v454 = vpop.f32.mrb[0].mxu0
    %v455 = vadd.f32 %v331, %v454
    %v456 = vpop.f32.mrb[0].mxu0
    %v457 = vpop.f32.mrb[0].mxu0
    %v458 = vadd.f32 %v331, %v457
    %v459 = vpop.f32.mrb[0].mxu0
    %460 = vmatprep.mubr.bf16.mxu0 0
    %461 = vmatmul.mubr.bf16.gmra.mrb[0].mxu0 %v309
    %v462 = vpop.f32.mrb[0].mxu0
    %v463 = vadd.f32 %v331, %v462
    %v464 = vpop.f32.mrb[0].mxu0
    %v465 = vpop.f32.mrb[0].mxu0
    %v466 = vadd.f32 %v331, %v465
    %v467 = vpop.f32.mrb[0].mxu0
    %468 = vmatprep.mubr.bf16.mxu0 0
    %469 = vmatmul.mubr.bf16.gmra.mrb[0].mxu0 %v310
    %v470 = vpop.f32.mrb[0].mxu0
    %v471 = vadd.f32 %v331, %v470
    %v472 = vpop.f32.mrb[0].mxu0
    %v473 = vpop.f32.mrb[0].mxu0
    %v474 = vadd.f32 %v331, %v473
    %v475 = vpop.f32.mrb[0].mxu0
    %476 = vdwg.mxu0
    %v477 = vmax.f32 %v415, 0.0
    %v478 = vmax.f32 %v418, 0.0
    %v479 = vmax.f32 %v423, 0.0
    %v480 = vmax.f32 %v426, 0.0
    %v481 = vmax.f32 %v431, 0.0
    %v482 = vmax.f32 %v434, 0.0
    %v483 = vmax.f32 %v439, 0.0
    %v484 = vmax.f32 %v442, 0.0
    %v485 = vmax.f32 %v447, 0.0
    %v486 = vmax.f32 %v450, 0.0
    %v487 = vmax.f32 %v455, 0.0
    %v488 = vmax.f32 %v458, 0.0
    %v489 = vmax.f32 %v463, 0.0
    %v490 = vmax.f32 %v466, 0.0
    %v491 = vmax.f32 %v471, 0.0
    %v492 = vmax.f32 %v474, 0.0
    %v493 = vpack.c.bf16 %v478, %v477
    %v494 = vpack.c.bf16 %v480, %v479
    %v495 = vpack.c.bf16 %v482, %v481
    %v496 = vpack.c.bf16 %v484, %v483
    %v497 = vpack.c.bf16 %v486, %v485
    %v498 = vpack.c.bf16 %v488, %v487
    %v499 = vpack.c.bf16 %v490, %v489
    %v500 = vpack.c.bf16 %v492, %v491
    %s501 = scalar_lea.vmem [#allocation3], 64
    %v502 = vld [vmem:[%s501] sm:$0xf]
    %v503 = vld [vmem:[%s501 + $0x4] sm:$0xf]
    %v504 = vld [vmem:[%s501 + $0x8] sm:$0xf]
    %v505 = vld [vmem:[%s501 + $0xc] sm:$0xf]
    %v506 = vld [vmem:[%s501 + $0x10] sm:$0xf]
    %v507 = vld [vmem:[%s501 + $0x14] sm:$0xf]
    %v508 = vld [vmem:[%s501 + $0x18] sm:$0xf]
    %v509 = vld [vmem:[%s501 + $0x1c] sm:$0xf]
    %v510 = vld [vmem:[%s501 + $0x20] sm:$0xf]
    %v511 = vld [vmem:[%s501 + $0x24] sm:$0xf]
    %v512 = vld [vmem:[%s501 + $0x28] sm:$0xf]
    %v513 = vld [vmem:[%s501 + $0x2c] sm:$0xf]
    %v514 = vld [vmem:[%s501 + $0x30] sm:$0xf]
    %v515 = vld [vmem:[%s501 + $0x34] sm:$0xf]
    %v516 = vld [vmem:[%s501 + $0x38] sm:$0xf]
    %v517 = vld [vmem:[%s501 + $0x3c] sm:$0xf]
    %v518 = vld [vmem:[%s3 + $0x3] sm:$0x1]
    %v519 = vlaneseq
    %v520 = vshrl.u32 %v519, 7
    %v521 = vsub.s32 0, %v520
    %v522 = vrot.slane %v518, %v521
    %v539 = vunpack.c.l.b16 %v502
    %v540 = vunpack.c.l.b16 %v503
    %v541 = vunpack.c.l.b16 %v504
    %v542 = vunpack.c.l.b16 %v505
    %v543 = vunpack.c.l.b16 %v506
    %v544 = vunpack.c.l.b16 %v507
    %v545 = vunpack.c.l.b16 %v508
    %v546 = vunpack.c.l.b16 %v509
    %v547 = vunpack.c.l.b16 %v510
    %v548 = vunpack.c.l.b16 %v511
    %v549 = vunpack.c.l.b16 %v512
    %v550 = vunpack.c.l.b16 %v513
    %v551 = vunpack.c.l.b16 %v514
    %v552 = vunpack.c.l.b16 %v515
    %v553 = vunpack.c.l.b16 %v516
    %v554 = vunpack.c.l.b16 %v517
    %v555 = vpack.c.b16 %v540, %v539
    %v556 = vpack.c.b16 %v542, %v541
    %v557 = vpack.c.b16 %v544, %v543
    %v558 = vpack.c.b16 %v546, %v545
    %v559 = vpack.c.b16 %v548, %v547
    %v560 = vpack.c.b16 %v550, %v549
    %v561 = vpack.c.b16 %v552, %v551
    %v562 = vpack.c.b16 %v554, %v553
    %571 = vmatprep.subr.bf16.mxu0 0
    %572 = vmatpush1.bf16.msra.mxu0 %v555
    %573 = vmatprep.subr.bf16.mxu0 0
    %574 = vmatpush1.bf16.msra.mxu0 %v556
    %575 = vmatprep.subr.bf16.mxu0 0
    %576 = vmatpush1.bf16.msra.mxu0 %v557
    %577 = vmatprep.subr.bf16.mxu0 0
    %578 = vmatpush1.bf16.msra.mxu0 %v558
    %579 = vmatprep.subr.bf16.mxu0 0
    %580 = vmatpush1.bf16.msra.mxu0 %v559
    %581 = vmatprep.subr.bf16.mxu0 0
    %582 = vmatpush1.bf16.msra.mxu0 %v560
    %583 = vmatprep.subr.bf16.mxu0 0
    %584 = vmatpush1.bf16.msra.mxu0 %v561
    %585 = vmatprep.subr.bf16.mxu0 0
    %586 = vmatpush1.bf16.msra.mxu0 %v562
    %587 = vmatprep.subr.bf16.mxu0 0
    %588 = vmatpush1.bf16.msra.mxu0 0
    %589 = vmatprep.subr.bf16.mxu0 0
    %590 = vmatpush1.bf16.msra.mxu0 0
    %591 = vmatprep.subr.bf16.mxu0 0
    %592 = vmatpush1.bf16.msra.mxu0 0
    %593 = vmatprep.subr.bf16.mxu0 0
    %594 = vmatpush1.bf16.msra.mxu0 0
    %595 = vmatprep.subr.bf16.mxu0 0
    %596 = vmatpush1.bf16.msra.mxu0 0
    %597 = vmatprep.subr.bf16.mxu0 0
    %598 = vmatpush1.bf16.msra.mxu0 0
    %599 = vmatprep.subr.bf16.mxu0 0
    %600 = vmatpush1.bf16.msra.mxu0 0
    %601 = vmatprep.subr.bf16.mxu0 0
    %602 = vmatpush1.bf16.msra.mxu0 0
    %603 = vmatprep.mubr.bf16.mxu0 0
    %604 = vmatmul.mubr.bf16.gmra.mrb[0].mxu0 %v493
    %v605 = vpop.f32.mrb[0].mxu0
    %v606 = vadd.f32 %v522, %v605
    %v607 = vpop.f32.mrb[0].mxu0
    %v608 = vpop.f32.mrb[0].mxu0
    %v609 = vadd.f32 %v522, %v608
    %v610 = vpop.f32.mrb[0].mxu0
    %611 = vmatprep.mubr.bf16.mxu0 0
    %612 = vmatmul.mubr.bf16.gmra.mrb[0].mxu0 %v494
    %v613 = vpop.f32.mrb[0].mxu0
    %v614 = vadd.f32 %v522, %v613
    %v615 = vpop.f32.mrb[0].mxu0
    %v616 = vpop.f32.mrb[0].mxu0
    %v617 = vadd.f32 %v522, %v616
    %v618 = vpop.f32.mrb[0].mxu0
    %619 = vmatprep.mubr.bf16.mxu0 0
    %620 = vmatmul.mubr.bf16.gmra.mrb[0].mxu0 %v495
    %v621 = vpop.f32.mrb[0].mxu0
    %v622 = vadd.f32 %v522, %v621
    %v623 = vpop.f32.mrb[0].mxu0
    %v624 = vpop.f32.mrb[0].mxu0
    %v625 = vadd.f32 %v522, %v624
    %v626 = vpop.f32.mrb[0].mxu0
    %627 = vmatprep.mubr.bf16.mxu0 0
    %628 = vmatmul.mubr.bf16.gmra.mrb[0].mxu0 %v496
    %v629 = vpop.f32.mrb[0].mxu0
    %v630 = vadd.f32 %v522, %v629
    %v631 = vpop.f32.mrb[0].mxu0
    %v632 = vpop.f32.mrb[0].mxu0
    %v633 = vadd.f32 %v522, %v632
    %v634 = vpop.f32.mrb[0].mxu0
    %635 = vmatprep.mubr.bf16.mxu0 0
    %636 = vmatmul.mubr.bf16.gmra.mrb[0].mxu0 %v497
    %v637 = vpop.f32.mrb[0].mxu0
    %v638 = vadd.f32 %v522, %v637
    %v639 = vpop.f32.mrb[0].mxu0
    %v640 = vpop.f32.mrb[0].mxu0
    %v641 = vadd.f32 %v522, %v640
    %v642 = vpop.f32.mrb[0].mxu0
    %643 = vmatprep.mubr.bf16.mxu0 0
    %644 = vmatmul.mubr.bf16.gmra.mrb[0].mxu0 %v498
    %v645 = vpop.f32.mrb[0].mxu0
    %v646 = vadd.f32 %v522, %v645
    %v647 = vpop.f32.mrb[0].mxu0
    %v648 = vpop.f32.mrb[0].mxu0
    %v649 = vadd.f32 %v522, %v648
    %v650 = vpop.f32.mrb[0].mxu0
    %651 = vmatprep.mubr.bf16.mxu0 0
    %652 = vmatmul.mubr.bf16.gmra.mrb[0].mxu0 %v499
    %v653 = vpop.f32.mrb[0].mxu0
    %v654 = vadd.f32 %v522, %v653
    %v655 = vpop.f32.mrb[0].mxu0
    %v656 = vpop.f32.mrb[0].mxu0
    %v657 = vadd.f32 %v522, %v656
    %v658 = vpop.f32.mrb[0].mxu0
    %659 = vmatprep.mubr.bf16.mxu0 0
    %660 = vmatmul.mubr.bf16.gmra.mrb[0].mxu0 %v500
    %v661 = vpop.f32.mrb[0].mxu0
    %v662 = vadd.f32 %v522, %v661
    %v663 = vpop.f32.mrb[0].mxu0
    %v664 = vpop.f32.mrb[0].mxu0
    %v665 = vadd.f32 %v522, %v664
    %v666 = vpop.f32.mrb[0].mxu0
    %667 = vdwg.mxu0
    %v668 = vmax.f32 %v606, 0.0
    %v669 = vmax.f32 %v609, 0.0
    %v670 = vmax.f32 %v614, 0.0
    %v671 = vmax.f32 %v617, 0.0
    %v672 = vmax.f32 %v622, 0.0
    %v673 = vmax.f32 %v625, 0.0
    %v674 = vmax.f32 %v630, 0.0
    %v675 = vmax.f32 %v633, 0.0
    %v676 = vmax.f32 %v638, 0.0
    %v677 = vmax.f32 %v641, 0.0
    %v678 = vmax.f32 %v646, 0.0
    %v679 = vmax.f32 %v649, 0.0
    %v680 = vmax.f32 %v654, 0.0
    %v681 = vmax.f32 %v657, 0.0
    %v682 = vmax.f32 %v662, 0.0
    %v683 = vmax.f32 %v665, 0.0
    %v684 = vadd.f32 %v668, %v272
    %v685 = vadd.f32 %v669, %v274
    %v686 = vadd.f32 %v670, %v276
    %v687 = vadd.f32 %v671, %v278
    %v688 = vadd.f32 %v672, %v280
    %v689 = vadd.f32 %v673, %v282
    %v690 = vadd.f32 %v674, %v284
    %v691 = vadd.f32 %v675, %v286
    %v692 = vadd.f32 %v676, %v288
    %v693 = vadd.f32 %v677, %v290
    %v694 = vadd.f32 %v678, %v292
    %v695 = vadd.f32 %v679, %v294
    %v696 = vadd.f32 %v680, %v296
    %v697 = vadd.f32 %v681, %v298
    %v698 = vadd.f32 %v682, %v300
    %v699 = vadd.f32 %v683, %v302
    %v700 = vld [vmem:[%s4] sm:$0xf]
    %v701 = vpack.c.bf16 %v685, %v684
    %v702 = vpack.c.bf16 %v687, %v686
    %v703 = vpack.c.bf16 %v689, %v688
    %v704 = vpack.c.bf16 %v691, %v690
    %v705 = vpack.c.bf16 %v693, %v692
    %v706 = vpack.c.bf16 %v695, %v694
    %v707 = vpack.c.bf16 %v697, %v696
    %v708 = vpack.c.bf16 %v699, %v698
    %s709 = sld [smem:[#allocation2]]
    %v710 = vstv %s709
    %711 = vmatprep.subr.bf16.mxu0 0
    %712 = vmatpush1.bf16.xpose.msra.mxu0 %v701
    %713 = vmatprep.subr.bf16.mxu0 0
    %714 = vmatpush1.bf16.xpose.msra.mxu0 %v702
    %715 = vmatprep.subr.bf16.mxu0 0
    %716 = vmatpush1.bf16.xpose.msra.mxu0 %v703
    %717 = vmatprep.subr.bf16.mxu0 0
    %718 = vmatpush1.bf16.xpose.msra.mxu0 %v704
    %719 = vmatprep.subr.bf16.mxu0 0
    %720 = vmatpush1.bf16.xpose.msra.mxu0 %v705
    %721 = vmatprep.subr.bf16.mxu0 0
    %722 = vmatpush1.bf16.xpose.msra.mxu0 %v706
    %723 = vmatprep.subr.bf16.mxu0 0
    %724 = vmatpush1.bf16.xpose.msra.mxu0 %v707
    %725 = vmatprep.subr.bf16.mxu0 0
    %726 = vmatpush1.bf16.xpose.msra.mxu0 %v708
    %727 = vmatprep.subr.bf16.mxu0 0
    %728 = vmatpush1.bf16.xpose.msra.mxu0 0
    %729 = vmatprep.subr.bf16.mxu0 0
    %730 = vmatpush1.bf16.xpose.msra.mxu0 0
    %731 = vmatprep.subr.bf16.mxu0 0
    %732 = vmatpush1.bf16.xpose.msra.mxu0 0
    %733 = vmatprep.subr.bf16.mxu0 0
    %734 = vmatpush1.bf16.xpose.msra.mxu0 0
    %735 = vmatprep.subr.bf16.mxu0 0
    %736 = vmatpush1.bf16.xpose.msra.mxu0 0
    %737 = vmatprep.subr.bf16.mxu0 0
    %738 = vmatpush1.bf16.xpose.msra.mxu0 0
    %739 = vmatprep.subr.bf16.mxu0 0
    %740 = vmatpush1.bf16.xpose.msra.mxu0 0
    %741 = vmatprep.subr.bf16.mxu0 0
    %742 = vmatpush1.bf16.xpose.msra.mxu0 0
    %743 = vmatprep.mubr.bf16.mxu0 0
    %744 = vmatmul.mubr.bf16.gmra.mrb[0].mxu0 %v700
    %v745 = vpop.f32.mrb[0].mxu0
    %v746 = vadd.f32 %v710, %v745
    %v747 = vpop.f32.mrb[0].mxu0
    %v748 = vpop.f32.mrb[0].mxu0
    %v749 = vpop.f32.mrb[0].mxu0
    %750 = vdwg.mxu0
    %v751 = vxor.u32 %v746, 2147483648
    %v752 = vmul.f32 %v751, 1.442695
    %v753 = vpow.pop %v752
    %v754 = vadd.f32 %v753, 1.0
    %v755 = vrcp.pop %v754
    %v756 = vmul.f32 1.0, %v755
    %757 = vst [vmem:[#allocation6] sm:$0xff] %v756
    // Predicated region
    $region30: #{tpu_custom_call.1} parent=1 // pred_check
      _
    $region31: #{tpu_custom_call.1} parent=1 // pred_check_branch
      %759 = sbr.rel (0) target = $region33
    $region32: #{tpu_custom_call.1} parent=1 // pred_region
      %s761 = ssub.s32 128, 128
      %762 = vsyncadd [#allocation5], %s761
      %s764 = sshll.u32 [#allocation6], 4
      %s765 = int_to_ptr.vmem [resolvable:$true] %s764
      %767 = dma.vmem_to_hbm [thread:$0]  %s765, 128, %s6, [#allocation5]
    $region33: #{tpu_custom_call.1} parent=1 // pred_fallthru
      _
    // Predicated region
    $region34: #{tpu_custom_call.1} parent=1 // pred_check
      _
    $region35: #{tpu_custom_call.1} parent=1 // pred_check_branch
      %769 = sbr.rel (0) target = $region37
    $region36: #{tpu_custom_call.1} parent=1 // pred_region
      %770 = dma.done [#allocation5], 128
    $region37: #{tpu_custom_call.1} parent=1 // pred_fallthru
      _
    %771 = vsyncpa [#allocation4], 1
    %772 = vsyncpa [#allocation5], 1

</llo_original>
